<compile_context>
chip_gen: v5e
topology: v5e:2x2
jax: 0.10.0
libtpu: 0.0.40
codegen_flags: <defaults>
</compile_context>

<pallas_src>
import jax
import jax.numpy as jnp
import numpy as np
from jax.experimental import pallas as pl
from jax.experimental.pallas import tpu as pltpu

H1 = 128      # fc1 width (already lane-aligned)
LANE = 128    # TPU lane width


def _round_up(n, m):
    return (n + m - 1) // m * m


# ---------------------------------------------------------------------------
# Kernel: one batch tile per grid step.
#   h1 = relu(x @ W1' + c1)      (bias+bn1 folded into W1', c1)
#   h2 = relu(h1 @ W2' + c2)     (bias+bn2 folded into W2', c2; padded to 128)
#   o  = h2 @ W3  + c3           (true num_classes width, no lane padding)
# Dropout layers are identity in eval mode.
# ---------------------------------------------------------------------------
def fcn_kernel(x_ref, w1_ref, c1_ref, w2_ref, c2_ref, w3_ref, c3_ref, o_ref):
    # In-kernel cast of the small (TB, D) tile (free on the VPU) instead of a
    # wrapper-side astype that would add a full extra HBM pass over x.
    x = x_ref[...].astype(w1_ref.dtype)

    h1 = jnp.dot(x, w1_ref[...], preferred_element_type=jnp.float32)
    h1 = jnp.maximum(h1 + c1_ref[...], 0.0)

    h2 = jnp.dot(h1.astype(w2_ref.dtype), w2_ref[...],
                 preferred_element_type=jnp.float32)
    h2 = jnp.maximum(h2 + c2_ref[...], 0.0)

    o = jnp.dot(h2.astype(w3_ref.dtype), w3_ref[...],
                preferred_element_type=jnp.float32) + c3_ref[...]
    o_ref[...] = o.astype(o_ref.dtype)


# ---------------------------------------------------------------------------
# Wrapper: batch-tiled pallas_call with VMEM-resident weights.
# ---------------------------------------------------------------------------
def fcn_forward(x, p, *, tb=4096, out_dtype=jnp.float32):
    """x: (B, input_dim) (any float dtype). p: output of prepare_params()."""
    B, D = x.shape
    C = p["num_classes"]
    H2_pad = p["w2"].shape[1]

    # Batch tile: multiple of 16 (covers f32 and bf16 sublane packing).
    TB = min(_round_up(tb, 16), _round_up(B, 16))
    B_pad = _round_up(B, TB)
    if B_pad != B:
        # Only pads when TB does not divide B; pick tb to divide B at call
        # sites with large known batches to skip this extra copy of x.
        x = jnp.pad(x, ((0, B_pad - B), (0, 0)))

    grid = (B_pad // TB,)

    def resident(a):  # whole array, same block for every grid step
        nd = a.ndim
        return pl.BlockSpec(a.shape, lambda i, _nd=nd: (0,) * _nd)

    in_specs = [
        pl.BlockSpec((TB, D), lambda i: (i, 0)),          # x: tiled over batch
        resident(p["w1"]), resident(p["c1"]),
        resident(p["w2"]), resident(p["c2"]),
        resident(p["w3"]), resident(p["c3"]),
    ]
    out_spec = pl.BlockSpec((TB, C), lambda i: (i, 0))

    param_arrays = [p[k] for k in ("w1", "c1", "w2", "c2", "w3", "c3")]
    bytes_params = sum(int(a.size) * a.dtype.itemsize for a in param_arrays)
    out_itemsize = jnp.dtype(out_dtype).itemsize
    cost = pl.CostEstimate(
        flops=2 * B_pad * (D * H1 + H1 * H2_pad + H2_pad * C),
        transcendentals=0,
        bytes_accessed=int(x.size) * x.dtype.itemsize
                       + B_pad * C * out_itemsize
                       + bytes_params,
    )

    out = pl.pallas_call(
        fcn_kernel,
        out_shape=jax.ShapeDtypeStruct((B_pad, C), out_dtype),
        grid_spec=pltpu.PrefetchScalarGridSpec(
            num_scalar_prefetch=0,
            grid=grid,
            in_specs=in_specs,
            out_specs=out_spec,
        ),
        compiler_params=pltpu.CompilerParams(
            dimension_semantics=("parallel",),   # shard batch tiles across TCs
        ),
        cost_estimate=cost,
    )(x, p["w1"], p["c1"], p["w2"], p["c2"], p["w3"], p["c3"])

    return out[:B]


# ---------------------------------------------------------------------------
# Synthetic PyTorch-style raw parameters (fc weights/biases + BN stats).
# ---------------------------------------------------------------------------
def init_params(key, input_dim, num_classes, eps=1e-5):
    ks = jax.random.split(key, 14)

    def linear(kw, kb, fan_in, fan_out):
        bound = 1.0 / np.sqrt(fan_in)
        w = jax.random.uniform(kw, (fan_in, fan_out), jnp.float32, -bound, bound)
        b = jax.random.uniform(kb, (1, fan_out), jnp.float32, -bound, bound)
        return w, b

    w1, b1 = linear(ks[0], ks[1], input_dim, H1)
    w2, b2 = linear(ks[2], ks[3], H1, 64)
    w3, b3 = linear(ks[4], ks[5], 64, num_classes)

    def bn(kg, kb2, km, kv, n):
        gamma = 1.0 + 0.1 * jax.random.normal(kg, (1, n), jnp.float32)
        beta = 0.1 * jax.random.normal(kb2, (1, n), jnp.float32)
        mean = 0.1 * jax.random.normal(km, (1, n), jnp.float32)
        var = jax.random.uniform(kv, (1, n), jnp.float32, 0.5, 1.5)
        return gamma, beta, mean, var

    bn1 = bn(ks[6], ks[7], ks[8], ks[9], H1)
    bn2 = bn(ks[10], ks[11], ks[12], ks[13], 64)

    return dict(w1=w1, b1=b1, bn1=bn1, w2=w2, b2=b2, bn2=bn2,
                w3=w3, b3=b3, eps=eps)


# ---------------------------------------------------------------------------
# Offline param prep: fold bias+BN into (W', shift), pad hidden2 64 -> 128
# (lane-dense intermediate), keep true num_classes width, optionally cast
# weights to bf16 (recommended on v6e/v7x).
# ---------------------------------------------------------------------------
def prepare_params(raw, dtype=jnp.float32):
    eps = raw["eps"]

    def fold(w, b, stats):
        gamma, beta, mean, var = stats
        scale = gamma / jnp.sqrt(var + eps)            # (1, N)
        shift = beta - mean * scale
        return w * scale, b * scale + shift            # y = x @ W' + c

    w1, c1 = fold(raw["w1"], raw["b1"], raw["bn1"])
    w2, c2 = fold(raw["w2"], raw["b2"], raw["bn2"])
    w3, c3 = raw["w3"], raw["b3"]

    # Hidden2 64 -> 128 lane padding (VMEM-internal). Pad columns of W2'/c2
    # give relu(0)=0 and the matching pad rows of W3 are zero, so exact.
    H2 = w2.shape[1]
    H2_pad = _round_up(H2, LANE)
    w2 = jnp.pad(w2, ((0, 0), (0, H2_pad - H2)))
    c2 = jnp.pad(c2, ((0, 0), (0, H2_pad - H2)))
    w3 = jnp.pad(w3, ((0, H2_pad - H2), (0, 0)))
    C = w3.shape[1]                                    # true num_classes

    cast = lambda a: a.astype(dtype)
    # Shifts stay f32 (added to the f32 MXU accumulator).
    return dict(w1=cast(w1), c1=c1.astype(jnp.float32),
                w2=cast(w2), c2=c2.astype(jnp.float32),
                w3=cast(w3), c3=c3.astype(jnp.float32),
                num_classes=C)


# ---------------------------------------------------------------------------
# Pure-JAX reference of the original (unfolded, unpadded) eval-mode forward.
# ---------------------------------------------------------------------------
def fcn_reference(x, raw):
    eps = raw["eps"]

    def bn(y, stats):
        gamma, beta, mean, var = stats
        return (y - mean) / jnp.sqrt(var + eps) * gamma + beta

    h1 = jnp.maximum(bn(x @ raw["w1"] + raw["b1"], raw["bn1"]), 0.0)
    h2 = jnp.maximum(bn(h1 @ raw["w2"] + raw["b2"], raw["bn2"]), 0.0)
    return h2 @ raw["w3"] + raw["b3"]


if __name__ == "__main__":
    key = jax.random.PRNGKey(0)
    input_dim, num_classes = 32, 10
    k_x1, k_x2, k_p = jax.random.split(key, 3)

    raw = init_params(k_p, input_dim, num_classes)
    prepared_f32 = prepare_params(raw, dtype=jnp.float32)

    # 1) small batch (single tile, grid=1)
    x1 = jax.random.normal(k_x1, (16, input_dim), jnp.float32)
    out1 = jax.block_until_ready(fcn_forward(x1, prepared_f32))
    np.testing.assert_allclose(np.asarray(out1),
                               np.asarray(fcn_reference(x1, raw)),
                               rtol=1e-2, atol=1e-2)

    # 2) ragged batch exercising the tiled, double-buffered, parallel path
    x2 = jax.random.normal(k_x2, (300, input_dim), jnp.float32)
    out2 = jax.block_until_ready(fcn_forward(x2, prepared_f32, tb=128))
    np.testing.assert_allclose(np.asarray(out2),
                               np.asarray(fcn_reference(x2, raw)),
                               rtol=1e-2, atol=1e-2)

    # 3) bf16 weights/activations (v6e/v7x MXU-native), f32 accumulation,
    #    f32 input cast in-kernel.
    prepared_bf16 = prepare_params(raw, dtype=jnp.bfloat16)
    out3 = jax.block_until_ready(fcn_forward(x2, prepared_bf16, tb=128))
    np.testing.assert_allclose(np.asarray(out3),
                               np.asarray(fcn_reference(x2, raw)),
                               rtol=8e-2, atol=8e-2)

    # 4) opt-in bf16 logits (halves writeback again; fine for argmax use)
    out4 = jax.block_until_ready(
        fcn_forward(x1, prepared_f32, out_dtype=jnp.bfloat16))
    np.testing.assert_allclose(np.asarray(out4.astype(jnp.float32)),
                               np.asarray(fcn_reference(x1, raw)),
                               rtol=5e-2, atol=5e-2)

    print("KERNEL_OK")
</pallas_src>

<mosaic_0001>
module attributes {stable_mosaic.version = 11 : i64} {
  func.func @fcn_kernel(%arg0: i32, %arg1: memref<16x32xf32, #tpu.memory_space<vmem>>, %arg2: memref<32x128xf32, #tpu.memory_space<vmem>>, %arg3: memref<1x128xf32, #tpu.memory_space<vmem>>, %arg4: memref<128x128xf32, #tpu.memory_space<vmem>>, %arg5: memref<1x128xf32, #tpu.memory_space<vmem>>, %arg6: memref<128x10xf32, #tpu.memory_space<vmem>>, %arg7: memref<1x10xf32, #tpu.memory_space<vmem>>, %arg8: memref<16x10xf32, #tpu.memory_space<vmem>>) attributes {dimension_semantics = [#tpu.dimension_semantics<parallel>], iteration_bounds = array<i64: 1>, scalar_prefetch = 0 : i64, scratch_operands = 0 : i64, tpu.core_type = #tpu.core_type<tc>, window_params = [{transform_indices = @transform_0, window_bounds = array<i64: 16, 32>}, {pipeline_mode = #tpu.pipeline_mode<synchronous>, transform_indices = @transform_1, window_bounds = array<i64: 32, 128>}, {pipeline_mode = #tpu.pipeline_mode<synchronous>, transform_indices = @transform_2, window_bounds = array<i64: 1, 128>}, {pipeline_mode = #tpu.pipeline_mode<synchronous>, transform_indices = @transform_3, window_bounds = array<i64: 128, 128>}, {pipeline_mode = #tpu.pipeline_mode<synchronous>, transform_indices = @transform_4, window_bounds = array<i64: 1, 128>}, {pipeline_mode = #tpu.pipeline_mode<synchronous>, transform_indices = @transform_5, window_bounds = array<i64: 128, 10>}, {pipeline_mode = #tpu.pipeline_mode<synchronous>, transform_indices = @transform_6, window_bounds = array<i64: 1, 10>}, {transform_indices = @transform_7, window_bounds = array<i64: 16, 10>}]} {
    %c0 = arith.constant 0 : index
    %c0_0 = arith.constant 0 : index
    %0 = vector.load %arg1[%c0, %c0_0] : memref<16x32xf32, #tpu.memory_space<vmem>>, vector<16x32xf32>
    %c0_1 = arith.constant 0 : index
    %c0_2 = arith.constant 0 : index
    %1 = vector.load %arg2[%c0_1, %c0_2] : memref<32x128xf32, #tpu.memory_space<vmem>>, vector<32x128xf32>
    %cst = arith.constant dense<0.000000e+00> : vector<16x128xf32>
    %2 = tpu.matmul %0, %1, %cst {dimension_numbers = #tpu.dot_dimension_numbers<[1], [0], [0], [1], [0, 0, 1, 1], [], []>} : vector<16x32xf32>, vector<32x128xf32>, vector<16x128xf32> -> vector<16x128xf32>
    %c0_3 = arith.constant 0 : index
    %c0_4 = arith.constant 0 : index
    %3 = vector.load %arg3[%c0_3, %c0_4] : memref<1x128xf32, #tpu.memory_space<vmem>>, vector<1x128xf32>
    %4 = vector.broadcast %3 : vector<1x128xf32> to vector<16x128xf32>
    %5 = arith.addf %2, %4 : vector<16x128xf32>
    %cst_5 = arith.constant 0.000000e+00 : f32
    %6 = vector.broadcast %cst_5 : f32 to vector<16x128xf32>
    %7 = arith.maximumf %5, %6 : vector<16x128xf32>
    %c0_6 = arith.constant 0 : index
    %c0_7 = arith.constant 0 : index
    %8 = vector.load %arg4[%c0_6, %c0_7] : memref<128x128xf32, #tpu.memory_space<vmem>>, vector<128x128xf32>
    %cst_8 = arith.constant dense<0.000000e+00> : vector<16x128xf32>
    %9 = tpu.matmul %7, %8, %cst_8 {dimension_numbers = #tpu.dot_dimension_numbers<[1], [0], [0], [1], [0, 0, 1, 1], [], []>} : vector<16x128xf32>, vector<128x128xf32>, vector<16x128xf32> -> vector<16x128xf32>
    %c0_9 = arith.constant 0 : index
    %c0_10 = arith.constant 0 : index
    %10 = vector.load %arg5[%c0_9, %c0_10] : memref<1x128xf32, #tpu.memory_space<vmem>>, vector<1x128xf32>
    %11 = vector.broadcast %10 : vector<1x128xf32> to vector<16x128xf32>
    %12 = arith.addf %9, %11 : vector<16x128xf32>
    %cst_11 = arith.constant 0.000000e+00 : f32
    %13 = vector.broadcast %cst_11 : f32 to vector<16x128xf32>
    %14 = arith.maximumf %12, %13 : vector<16x128xf32>
    %c0_12 = arith.constant 0 : index
    %c0_13 = arith.constant 0 : index
    %15 = vector.load %arg6[%c0_12, %c0_13] : memref<128x10xf32, #tpu.memory_space<vmem>>, vector<128x10xf32>
    %cst_14 = arith.constant dense<0.000000e+00> : vector<16x10xf32>
    %16 = tpu.matmul %14, %15, %cst_14 {dimension_numbers = #tpu.dot_dimension_numbers<[1], [0], [0], [1], [0, 0, 1, 1], [], []>} : vector<16x128xf32>, vector<128x10xf32>, vector<16x10xf32> -> vector<16x10xf32>
    %c0_15 = arith.constant 0 : index
    %c0_16 = arith.constant 0 : index
    %17 = vector.load %arg7[%c0_15, %c0_16] : memref<1x10xf32, #tpu.memory_space<vmem>>, vector<1x10xf32>
    %18 = vector.broadcast %17 : vector<1x10xf32> to vector<16x10xf32>
    %19 = arith.addf %16, %18 : vector<16x10xf32>
    %c0_17 = arith.constant 0 : index
    %c0_18 = arith.constant 0 : index
    %20 = vector.load %arg8[%c0_17, %c0_18] : memref<16x10xf32, #tpu.memory_space<vmem>>, vector<16x10xf32>
    tpu.vector_store %arg8[%c0_17, %c0_18], %19 {strides = array<i32>} : memref<16x10xf32, #tpu.memory_space<vmem>>, vector<16x10xf32>,
    return
  }
  func.func @transform_0(%arg0: i32) -> (i32, i32) {
    %c0_i32 = arith.constant 0 : i32
    %c0_i32_0 = arith.constant 0 : i32
    return %arg0, %c0_i32 : i32, i32
  }
  func.func @transform_1(%arg0: i32) -> (i32, i32) {
    %c0_i32 = arith.constant 0 : i32
    %c0_i32_0 = arith.constant 0 : i32
    %c0_i32_1 = arith.constant 0 : i32
    return %c0_i32, %c0_i32_0 : i32, i32
  }
  func.func @transform_2(%arg0: i32) -> (i32, i32) {
    %c0_i32 = arith.constant 0 : i32
    %c0_i32_0 = arith.constant 0 : i32
    %c0_i32_1 = arith.constant 0 : i32
    return %c0_i32, %c0_i32_0 : i32, i32
  }
  func.func @transform_3(%arg0: i32) -> (i32, i32) {
    %c0_i32 = arith.constant 0 : i32
    %c0_i32_0 = arith.constant 0 : i32
    %c0_i32_1 = arith.constant 0 : i32
    return %c0_i32, %c0_i32_0 : i32, i32
  }
  func.func @transform_4(%arg0: i32) -> (i32, i32) {
    %c0_i32 = arith.constant 0 : i32
    %c0_i32_0 = arith.constant 0 : i32
    %c0_i32_1 = arith.constant 0 : i32
    return %c0_i32, %c0_i32_0 : i32, i32
  }
  func.func @transform_5(%arg0: i32) -> (i32, i32) {
    %c0_i32 = arith.constant 0 : i32
    %c0_i32_0 = arith.constant 0 : i32
    %c0_i32_1 = arith.constant 0 : i32
    return %c0_i32, %c0_i32_0 : i32, i32
  }
  func.func @transform_6(%arg0: i32) -> (i32, i32) {
    %c0_i32 = arith.constant 0 : i32
    %c0_i32_0 = arith.constant 0 : i32
    %c0_i32_1 = arith.constant 0 : i32
    return %c0_i32, %c0_i32_0 : i32, i32
  }
  func.func @transform_7(%arg0: i32) -> (i32, i32) {
    %c0_i32 = arith.constant 0 : i32
    %c0_i32_0 = arith.constant 0 : i32
    return %arg0, %c0_i32 : i32, i32
  }
}

</mosaic_0001>

<llo_original>
// kernel: tpu_custom_call.1
$region0: #{tpu_custom_call.1}
  #allocation0 [shape = 'u32[]', space=smem, size = 0x4, offset = 0x4, fixed_abs, tag = 'smem constant byte address 0x4 - core index']
  #allocation1 [shape = 'u32[72,128]{1,0:T(1,128)}', space=vmem, size = 0x9000, scoped, tag = 'internal scratch']
  %s0 = inlined_call_operand.vmem [shape: f32[16,32], index: 0, kind: input, shape index: {}]
  %s1 = inlined_call_operand.hbm [shape: f32[32,128], index: 1, kind: input, shape index: {}]
  %s2 = inlined_call_operand.vmem [shape: f32[1,128], index: 2, kind: input, shape index: {}]
  %s3 = inlined_call_operand.vmem [shape: f32[128,128], index: 3, kind: input, shape index: {}]
  %s4 = inlined_call_operand.vmem [shape: f32[1,128], index: 4, kind: input, shape index: {}]
  %s5 = inlined_call_operand.vmem [shape: f32[128,10], index: 5, kind: input, shape index: {}]
  %s6 = inlined_call_operand.vmem [shape: f32[1,10], index: 6, kind: input, shape index: {}]
  %s7 = inlined_call_operand.hbm [shape: f32[16,10], index: 7, kind: output, shape index: {}]
  %s8 = sld [smem:[#allocation0]]
  $region42: #{tpu_custom_call.1} parent=0
    _
  %s10 = ssub.s32 1, %s8
  %s11 = scalar_select 0, %s10, %s8
  $region1: #{tpu_custom_call.1} parent=0
    #allocation2 [shape = 'u8[16384]{0}', space=vmem, size = 0x4000, scoped, tag = 'input window, operand 1, single buffered']
    #allocation3 [shape = 's32[1]{0}', space=sflag, size = 0x4, scoped, tag = 'scoped memory for tpu_custom_call.1']
    #allocation4 [shape = 's32[1]{0}', space=sflag, size = 0x4, scoped, tag = 'scoped memory for tpu_custom_call.1']
    #allocation5 [shape = 'u8[8192]{0}', space=vmem, size = 0x2000, scoped, tag = 'output window, operand 0, single buffered']
    %12 = vsyncpa [#allocation3], 0
    %13 = vsyncpa [#allocation4], 0
    // Predicated region
    $region2: #{tpu_custom_call.1} parent=1 // pred_check
      _
    $region3: #{tpu_custom_call.1} parent=1 // pred_check_branch
      %15 = sbr.rel (0) target = $region5
    $region4: #{tpu_custom_call.1} parent=1 // pred_region
      _
    $region5: #{tpu_custom_call.1} parent=1 // pred_fallthru
      _
    // Predicated region
    $region6: #{tpu_custom_call.1} parent=1 // pred_check
      _
    $region7: #{tpu_custom_call.1} parent=1 // pred_check_branch
      %17 = sbr.rel (0) target = $region9
    $region8: #{tpu_custom_call.1} parent=1 // pred_region
      %19 = vsyncadd [#allocation3], 0
      %s20 = sshll.u32 %s1, 4
      %s21 = int_to_ptr.hbm [resolvable:$true] %s20
      %s22 = sshll.u32 [#allocation2], 4
      %s23 = int_to_ptr.vmem [resolvable:$true] %s22
      %28 = dma.hbm_to_vmem [thread:$0]  %s21, 512, %s23, [#allocation3], 128, 128, 8
    $region9: #{tpu_custom_call.1} parent=1 // pred_fallthru
      _
    // Predicated region
    $region10: #{tpu_custom_call.1} parent=1 // pred_check
      _
    $region11: #{tpu_custom_call.1} parent=1 // pred_check_branch
      %30 = sbr.rel (0) target = $region13
    $region12: #{tpu_custom_call.1} parent=1 // pred_region
      _
    $region13: #{tpu_custom_call.1} parent=1 // pred_fallthru
      _
    // Predicated region
    $region14: #{tpu_custom_call.1} parent=1 // pred_check
      _
    $region15: #{tpu_custom_call.1} parent=1 // pred_check_branch
      %32 = sbr.rel (0) target = $region17
    $region16: #{tpu_custom_call.1} parent=1 // pred_region
      _
    $region17: #{tpu_custom_call.1} parent=1 // pred_fallthru
      _
    // Predicated region
    $region18: #{tpu_custom_call.1} parent=1 // pred_check
      _
    $region19: #{tpu_custom_call.1} parent=1 // pred_check_branch
      %34 = sbr.rel (0) target = $region21
    $region20: #{tpu_custom_call.1} parent=1 // pred_region
      _
    $region21: #{tpu_custom_call.1} parent=1 // pred_fallthru
      _
    // Predicated region
    $region22: #{tpu_custom_call.1} parent=1 // pred_check
      _
    $region23: #{tpu_custom_call.1} parent=1 // pred_check_branch
      %36 = sbr.rel (0) target = $region25
    $region24: #{tpu_custom_call.1} parent=1 // pred_region
      _
    $region25: #{tpu_custom_call.1} parent=1 // pred_fallthru
      _
    // Predicated region
    $region26: #{tpu_custom_call.1} parent=1 // pred_check
      _
    $region27: #{tpu_custom_call.1} parent=1 // pred_check_branch
      %38 = sbr.rel (0) target = $region29
    $region28: #{tpu_custom_call.1} parent=1 // pred_region
      _
    $region29: #{tpu_custom_call.1} parent=1 // pred_fallthru
      _
    // Predicated region
    $region30: #{tpu_custom_call.1} parent=1 // pred_check
      _
    $region31: #{tpu_custom_call.1} parent=1 // pred_check_branch
      %40 = sbr.rel (0) target = $region33
    $region32: #{tpu_custom_call.1} parent=1 // pred_region
      %42 = dma.done [#allocation3], 512
    $region33: #{tpu_custom_call.1} parent=1 // pred_fallthru
      _
    %v43 = vld [vmem:[%s0] sm:$0xff]
    %v44 = vld [vmem:[%s0 + $0x8] sm:$0xff]
    %v45 = vld [vmem:[#allocation2] sm:$0xff]
    %v46 = vld [vmem:[#allocation2 + $0x8] sm:$0xff]
    %v47 = vld [vmem:[#allocation2 + $0x10] sm:$0xff]
    %v48 = vld [vmem:[#allocation2 + $0x18] sm:$0xff]
    %v49 = vld [vmem:[%s2] sm:$0x1]
    %v51 = vperm.slane %v49, 0
    %vm53 = vcmask 261120
    %v55 = vsel %vm53, %v43, 0
    %v58 = vsel %vm53, %v44, 0
    %60 = vmatpush.msra.mxu0 0.0
    %61 = vmatpush.msra.mxu0 0.0
    %62 = vmatpush.msra.mxu0 0.0
    %63 = vmatpush.msra.mxu0 0.0
    %64 = vmatpush.msra.mxu0 0.0
    %65 = vmatpush.msra.mxu0 0.0
    %66 = vmatpush.msra.mxu0 0.0
    %67 = vmatpush.msra.mxu0 0.0
    %68 = vmatpush.msra.mxu0 0.0
    %69 = vmatpush.msra.mxu0 0.0
    %70 = vmatpush.msra.mxu0 0.0
    %71 = vmatpush.msra.mxu0 0.0
    %72 = vmatpush.msra.mxu0 %v48
    %73 = vmatpush.msra.mxu0 %v47
    %74 = vmatpush.msra.mxu0 %v46
    %75 = vmatpush.msra.mxu0 %v45
    %76 = vmatmul.f32.gmra.mxu0 %v55
    %v77 = vpop.f32.mrf.mxu0
    %v78 = vadd.f32 %v51, %v77
    %79 = vmatmul.f32.gmra.mxu0 %v58
    %v80 = vpop.f32.mrf.mxu0
    %v81 = vadd.f32 %v51, %v80
    %82 = vdwg.mxu0
    %v83 = vmax.f32 %v78, 0.0
    %v84 = vmax.f32 %v81, 0.0
    %v85 = vld [vmem:[%s3] sm:$0xff]
    %v86 = vld [vmem:[%s3 + $0x8] sm:$0xff]
    %v87 = vld [vmem:[%s3 + $0x10] sm:$0xff]
    %v88 = vld [vmem:[%s3 + $0x18] sm:$0xff]
    %v89 = vld [vmem:[%s3 + $0x20] sm:$0xff]
    %v90 = vld [vmem:[%s3 + $0x28] sm:$0xff]
    %v91 = vld [vmem:[%s3 + $0x30] sm:$0xff]
    %v92 = vld [vmem:[%s3 + $0x38] sm:$0xff]
    %v93 = vld [vmem:[%s3 + $0x40] sm:$0xff]
    %v94 = vld [vmem:[%s3 + $0x48] sm:$0xff]
    %v95 = vld [vmem:[%s3 + $0x50] sm:$0xff]
    %v96 = vld [vmem:[%s3 + $0x58] sm:$0xff]
    %v97 = vld [vmem:[%s3 + $0x60] sm:$0xff]
    %v98 = vld [vmem:[%s3 + $0x68] sm:$0xff]
    %v99 = vld [vmem:[%s3 + $0x70] sm:$0xff]
    %v100 = vld [vmem:[%s3 + $0x78] sm:$0xff]
    %v101 = vld [vmem:[%s4] sm:$0x1]
    %v103 = vperm.slane %v101, 0
    %105 = vmatpush.msra.mxu0 %v100
    %106 = vmatpush.msra.mxu0 %v99
    %107 = vmatpush.msra.mxu0 %v98
    %108 = vmatpush.msra.mxu0 %v97
    %109 = vmatpush.msra.mxu0 %v96
    %110 = vmatpush.msra.mxu0 %v95
    %111 = vmatpush.msra.mxu0 %v94
    %112 = vmatpush.msra.mxu0 %v93
    %113 = vmatpush.msra.mxu0 %v92
    %114 = vmatpush.msra.mxu0 %v91
    %115 = vmatpush.msra.mxu0 %v90
    %116 = vmatpush.msra.mxu0 %v89
    %117 = vmatpush.msra.mxu0 %v88
    %118 = vmatpush.msra.mxu0 %v87
    %119 = vmatpush.msra.mxu0 %v86
    %120 = vmatpush.msra.mxu0 %v85
    %121 = vmatmul.f32.gmra.mxu0 %v83
    %v122 = vpop.f32.mrf.mxu0
    %v123 = vadd.f32 %v103, %v122
    %124 = vmatmul.f32.gmra.mxu0 %v84
    %v125 = vpop.f32.mrf.mxu0
    %v126 = vadd.f32 %v103, %v125
    %127 = vdwg.mxu0
    %v128 = vmax.f32 %v123, 0.0
    %v129 = vmax.f32 %v126, 0.0
    %v130 = vld [vmem:[%s5] sm:$0xff]
    %v131 = vld [vmem:[%s5 + $0x8] sm:$0xff]
    %v132 = vld [vmem:[%s5 + $0x10] sm:$0xff]
    %v133 = vld [vmem:[%s5 + $0x18] sm:$0xff]
    %v134 = vld [vmem:[%s5 + $0x20] sm:$0xff]
    %v135 = vld [vmem:[%s5 + $0x28] sm:$0xff]
    %v136 = vld [vmem:[%s5 + $0x30] sm:$0xff]
    %v137 = vld [vmem:[%s5 + $0x38] sm:$0xff]
    %v138 = vld [vmem:[%s5 + $0x40] sm:$0xff]
    %v139 = vld [vmem:[%s5 + $0x48] sm:$0xff]
    %v140 = vld [vmem:[%s5 + $0x50] sm:$0xff]
    %v141 = vld [vmem:[%s5 + $0x58] sm:$0xff]
    %v142 = vld [vmem:[%s5 + $0x60] sm:$0xff]
    %v143 = vld [vmem:[%s5 + $0x68] sm:$0xff]
    %v144 = vld [vmem:[%s5 + $0x70] sm:$0xff]
    %v145 = vld [vmem:[%s5 + $0x78] sm:$0xff]
    %v146 = vld [vmem:[%s6] sm:$0x1]
    %v148 = vperm.slane %v146, 0
    %150 = vmatpush.msra.mxu0 %v145
    %151 = vmatpush.msra.mxu0 %v144
    %152 = vmatpush.msra.mxu0 %v143
    %153 = vmatpush.msra.mxu0 %v142
    %154 = vmatpush.msra.mxu0 %v141
    %155 = vmatpush.msra.mxu0 %v140
    %156 = vmatpush.msra.mxu0 %v139
    %157 = vmatpush.msra.mxu0 %v138
    %158 = vmatpush.msra.mxu0 %v137
    %159 = vmatpush.msra.mxu0 %v136
    %160 = vmatpush.msra.mxu0 %v135
    %161 = vmatpush.msra.mxu0 %v134
    %162 = vmatpush.msra.mxu0 %v133
    %163 = vmatpush.msra.mxu0 %v132
    %164 = vmatpush.msra.mxu0 %v131
    %165 = vmatpush.msra.mxu0 %v130
    %166 = vmatmul.f32.gmra.mxu0 %v128
    %v167 = vpop.f32.mrf.mxu0
    %v168 = vadd.f32 %v148, %v167
    %169 = vmatmul.f32.gmra.mxu0 %v129
    %v170 = vpop.f32.mrf.mxu0
    %v171 = vadd.f32 %v148, %v170
    %172 = vdwg.mxu0
    %vm173 = vcmask 80896
    %174 = vst.msk [vmem:[#allocation5] sm:$0xff] %vm173, %v168
    %175 = vst.msk [vmem:[#allocation5 + $0x8] sm:$0xff] %vm173, %v171
    // Predicated region
    $region34: #{tpu_custom_call.1} parent=1 // pred_check
      _
    $region35: #{tpu_custom_call.1} parent=1 // pred_check_branch
      %177 = sbr.rel (0) target = $region37
    $region36: #{tpu_custom_call.1} parent=1 // pred_region
      %179 = vsyncadd [#allocation4], 0
      %s180 = sshll.u32 [#allocation5], 4
      %s181 = int_to_ptr.vmem [resolvable:$true] %s180
      %s182 = sshll.u32 %s7, 4
      %s183 = int_to_ptr.hbm [resolvable:$true] %s182
      %188 = dma.vmem_to_hbm [thread:$0]  %s181, 256, %s183, [#allocation4], 128, 128, 8
    $region37: #{tpu_custom_call.1} parent=1 // pred_fallthru
      _
    // Predicated region
    $region38: #{tpu_custom_call.1} parent=1 // pred_check
      _
    $region39: #{tpu_custom_call.1} parent=1 // pred_check_branch
      %190 = sbr.rel (0) target = $region41
    $region40: #{tpu_custom_call.1} parent=1 // pred_region
      %192 = dma.done [#allocation4], 256
    $region41: #{tpu_custom_call.1} parent=1 // pred_fallthru
      _
    %193 = vsyncpa [#allocation3], 1
    %194 = vsyncpa [#allocation4], 1

</llo_original>
